<compile_context>
chip_gen: v7x
topology: tpu7x:2x2x1
jax: 0.10.0
libtpu: 0.0.40
codegen_flags: <defaults>
</compile_context>

<pallas_src>
import functools

import jax
import jax.numpy as jnp
from jax import lax
from jax.experimental import pallas as pl
from jax.experimental.pallas import tpu as pltpu


# ----------------------------- small helpers ---------------------------------

def _bf16(x):
    return x.astype(jnp.bfloat16)


def _layernorm(x, w, b, eps=1e-5):
    mu = jnp.mean(x, axis=-1, keepdims=True)
    var = jnp.mean(jnp.square(x - mu), axis=-1, keepdims=True)
    return (x - mu) * lax.rsqrt(var + eps) * w + b


def _softmax_eup(x):
    # max-subtracted softmax; the denominator reciprocal goes to the EUP slot.
    x = x - jnp.max(x, axis=-1, keepdims=True)
    e = jnp.exp(x)
    return e * pl.reciprocal(jnp.sum(e, axis=-1, keepdims=True), approx=True)


def _l2norm(x, eps=1e-12):
    ss = jnp.sum(x * x, axis=-1, keepdims=True)
    return x * lax.rsqrt(jnp.maximum(ss, eps * eps))


def _round_up(n, m):
    return ((n + m - 1) // m) * m


# -------------------------- per-generation budgets ----------------------------

_VMEM_LIMIT = None


def _vmem_limit_bytes():
    """~80% of physical per-core VMEM (~51 MiB v7x, ~102 MiB v5e/v6e), capped."""
    global _VMEM_LIMIT
    if _VMEM_LIMIT is None:
        cap = None
        try:
            cap = getattr(pltpu.get_tpu_info(), 'vmem_capacity_bytes', None)
        except Exception:
            cap = None
        if not cap:
            cap = 64 * 1024 * 1024
        _VMEM_LIMIT = min(int(cap) * 4 // 5, 112 * 1024 * 1024)
    return _VMEM_LIMIT


_BUFFERED_1_OK = None


def _buffered_weights_supported():
    """Probe whether pipeline_mode=pl.Buffered(1) lowers on this jax/libtpu."""
    global _BUFFERED_1_OK
    if _BUFFERED_1_OK is not None:
        return _BUFFERED_1_OK

    def probe(w_ref, x_ref, o_ref):
        o_ref[...] = x_ref[...] + w_ref[...]

    try:
        w = jnp.zeros((8, 128), jnp.float32)
        x = jnp.zeros((2, 8, 128), jnp.float32)
        out = pl.pallas_call(
            probe,
            out_shape=jax.ShapeDtypeStruct((2, 8, 128), jnp.float32),
            grid=(2,),
            in_specs=[pl.BlockSpec((8, 128), lambda b: (0, 0),
                                   pipeline_mode=pl.Buffered(1)),
                      pl.BlockSpec((1, 8, 128), lambda b: (b, 0, 0))],
            out_specs=pl.BlockSpec((1, 8, 128), lambda b: (b, 0, 0)),
        )(w, x)
        jax.block_until_ready(out)
        _BUFFERED_1_OK = True
    except Exception:
        _BUFFERED_1_OK = False
    return _BUFFERED_1_OK


def _weight_spec(arr):
    # Grid-invariant operand: single-buffer it so large weights are not
    # double-buffered in VMEM (critical at real CLIP sizes / v7x 64 MiB).
    shp = arr.shape
    idx = lambda b, _r=len(shp): (0,) * _r
    if _buffered_weights_supported():
        return pl.BlockSpec(shp, idx, pipeline_mode=pl.Buffered(1))
    return pl.BlockSpec(shp, idx)


def _act_spec(bt, L, E):
    return pl.BlockSpec((bt, L, E), lambda b: (b, 0, 0))


def _compiler_params():
    return pltpu.CompilerParams(dimension_semantics=("parallel",),
                                vmem_limit_bytes=_vmem_limit_bytes())


def _choose_bt(B, budget, per_sample):
    """Largest batch tile (divisor of B) fitting `budget` bytes; 0 if even
    bt=1 does not fit.  Keeps >=2 grid steps when B allows so both v7x
    TensorCores get work (near-free on single-TC v5e/v6e)."""
    if budget < per_sample:
        return 0
    bt = 1
    for d in range(2, B + 1):
        if B % d or B // d < 2:
            continue
        if d * per_sample <= budget:
            bt = d
    return bt


def _plan_layers(B, L, E, heads, limit):
    """Decide fused vs. split per-layer call and the batch tile Bt."""
    buf = 1 if _buffered_weights_supported() else 2
    slack = 4 * 1024 * 1024
    per_attn = 56 * L * E + 16 * heads * L * L     # rough per-sample VMEM bytes
    per_mlp = 56 * L * E
    w_attn = 2 * 4 * E * E                         # bf16: wqkv (E,3E) + wo (E,E)
    w_mlp = 2 * 8 * E * E                          # bf16: w1 (E,4E) + w2 (4E,E)
    bt = _choose_bt(B, limit - buf * (w_attn + w_mlp) - slack,
                    per_attn + per_mlp)
    if bt:
        return True, bt, bt
    bt_a = max(1, _choose_bt(B, limit - buf * w_attn - slack, per_attn))
    bt_m = max(1, _choose_bt(B, limit - buf * w_mlp - slack, per_mlp))
    return False, bt_a, bt_m


# ------------------------------ core block math -------------------------------

def _attn_core(x2, bt, L, ln1w, ln1b, wqkv, bqkv, wo, bo, *, n_head, l_real):
    # x2: (bt*L, E) f32; residual attention (pre-LN), padded KEYS masked.
    E = x2.shape[-1]
    hd = E // n_head
    xn = _bf16(_layernorm(x2, ln1w, ln1b))
    # Fused QKV projection; 1/sqrt(head_dim) is folded into the q columns of
    # wqkv/bqkv at parameter-prep time.
    qkv = jnp.dot(xn, wqkv, preferred_element_type=jnp.float32) + bqkv
    q = qkv[:, 0:E].reshape(bt, L, n_head, hd)
    k = qkv[:, E:2 * E].reshape(bt, L, n_head, hd)
    v = qkv[:, 2 * E:3 * E].reshape(bt, L, n_head, hd)
    key_idx = lax.broadcasted_iota(jnp.int32, (1, L), 1)
    # TODO(synk): the static per-sample loop keeps the head-batched einsum form
    #             known to lower; a merged (bt*H) batch dim / pltpu.einshape
    #             layout could remove the reshape relayouts around hd.
    o_rows = []
    for b in range(bt):
        qb, kb, vb = _bf16(q[b]), _bf16(k[b]), _bf16(v[b])          # (L, H, hd)
        s = jnp.einsum('lhd,mhd->hlm', qb, kb,
                       preferred_element_type=jnp.float32)          # (H, L, L)
        s = jnp.where(key_idx < l_real, s, -1e30)                   # pad mask
        p = _softmax_eup(s)
        ob = jnp.einsum('hlm,mhd->lhd', _bf16(p), vb,
                        preferred_element_type=jnp.float32)         # (L, H, hd)
        o_rows.append(ob.reshape(L, E))
    o = o_rows[0] if bt == 1 else jnp.concatenate(o_rows, axis=0)   # (bt*L, E)
    attn = jnp.dot(_bf16(o), wo, preferred_element_type=jnp.float32) + bo
    return x2 + attn


def _mlp_core(x2, ln2w, ln2b, w1, b1, w2, b2):
    xn = _bf16(_layernorm(x2, ln2w, ln2b))
    h1 = jnp.dot(xn, w1, preferred_element_type=jnp.float32) + b1
    h1 = h1 * jax.nn.sigmoid(1.702 * h1)                            # QuickGELU
    h2 = jnp.dot(_bf16(h1), w2, preferred_element_type=jnp.float32) + b2
    return x2 + h2


# --------------------------------- kernels -----------------------------------

def patch_embed_kernel(patch_ref, wt_ref, cls_ref, pos_ref, lnw_ref, lnb_ref,
                       out_ref, *, n_patch, l_pad):
    # patch_ref: (1, Np, K) f32   wt_ref: (K, E) bf16   cls: (1,E)  pos: (L,E)
    emb = jnp.dot(_bf16(patch_ref[0]), wt_ref[...],
                  preferred_element_type=jnp.float32)                # (Np, E)
    tok = jnp.concatenate([cls_ref[...], emb], axis=0) + pos_ref[...]
    tok = _layernorm(tok, lnw_ref[...], lnb_ref[...])                # (1+Np, E)
    pad = l_pad - 1 - n_patch
    if pad:
        tok = jnp.concatenate(
            [tok, jnp.zeros((pad, tok.shape[1]), jnp.float32)], axis=0)
    out_ref[0] = tok.astype(out_ref.dtype)       # one lane/sublane-dense store


def layer_kernel(x_ref, ln1w, ln1b, wqkv, bqkv, wo, bo,
                 ln2w, ln2b, w1, b1, w2, b2, out_ref, *, n_head, l_real):
    # Fused residual-attention + MLP block; x_ref: (bt, L, E) bf16.
    bt, L, E = x_ref.shape
    x2 = x_ref[...].astype(jnp.float32).reshape(bt * L, E)
    x2 = _attn_core(x2, bt, L, ln1w[...], ln1b[...], wqkv[...], bqkv[...],
                    wo[...], bo[...], n_head=n_head, l_real=l_real)
    x2 = _mlp_core(x2, ln2w[...], ln2b[...], w1[...], b1[...], w2[...], b2[...])
    out_ref[...] = x2.reshape(bt, L, E).astype(out_ref.dtype)


def attn_block_kernel(x_ref, ln1w, ln1b, wqkv, bqkv, wo, bo, out_ref, *,
                      n_head, l_real):
    # Split fallback (VMEM-tight configs, e.g. v7x without Buffered(1)).
    bt, L, E = x_ref.shape
    x2 = x_ref[...].astype(jnp.float32).reshape(bt * L, E)
    y = _attn_core(x2, bt, L, ln1w[...], ln1b[...], wqkv[...], bqkv[...],
                   wo[...], bo[...], n_head=n_head, l_real=l_real)
    out_ref[...] = y.reshape(bt, L, E).astype(out_ref.dtype)


def mlp_block_kernel(x_ref, ln2w, ln2b, w1, b1, w2, b2, out_ref):
    bt, L, E = x_ref.shape
    x2 = x_ref[...].astype(jnp.float32).reshape(bt * L, E)
    y = _mlp_core(x2, ln2w[...], ln2b[...], w1[...], b1[...], w2[...], b2[...])
    out_ref[...] = y.reshape(bt, L, E).astype(out_ref.dtype)


def register_kernel(x_ref, infon_ref, wlin, blin, ln2w, ln2b, wffn, bffn,
                    out_ref):
    # x_ref: (bt, L, E) bf16; infon_ref: (num, D) bf16 pre-normalized in XLA
    # (grid-invariant -> hoisted out of the kernel).
    bt, L, E = x_ref.shape
    x2 = x_ref[...].astype(jnp.float32).reshape(bt * L, E)
    res = x2
    xl = jnp.dot(_bf16(x2), wlin[...],
                 preferred_element_type=jnp.float32) + blin[...]     # (bt*L, D)
    xn = _bf16(_l2norm(xl))
    infon = infon_ref[...]
    scores = jnp.einsum('ld,nd->ln', xn, infon,
                        preferred_element_type=jnp.float32)          # (bt*L, num)
    attn = _softmax_eup(scores)
    out = jnp.dot(_bf16(attn), infon,
                  preferred_element_type=jnp.float32)                # (bt*L, D)
    out = jnp.dot(_bf16(_layernorm(out, ln2w[...], ln2b[...])), wffn[...],
                  preferred_element_type=jnp.float32) + bffn[...] + res
    out_ref[...] = jnp.maximum(out, 0.0).reshape(bt, L, E).astype(out_ref.dtype)


# ---------------------------- pallas_call wrappers ----------------------------

def patch_embed(patches, p, *, l_pad):
    B, Np, K = patches.shape
    E = p['pos'].shape[1]
    return pl.pallas_call(
        functools.partial(patch_embed_kernel, n_patch=Np, l_pad=l_pad),
        out_shape=jax.ShapeDtypeStruct((B, l_pad, E), jnp.bfloat16),
        grid=(B,),
        in_specs=[pl.BlockSpec((1, Np, K), lambda b: (b, 0, 0)),
                  _weight_spec(p['conv_w_t']),
                  _weight_spec(p['cls']),
                  _weight_spec(p['pos']),
                  _weight_spec(p['ln_pre_w']),
                  _weight_spec(p['ln_pre_b'])],
        out_specs=pl.BlockSpec((1, l_pad, E), lambda b: (b, 0, 0)),
        compiler_params=_compiler_params(),
    )(patches, p['conv_w_t'], p['cls'], p['pos'], p['ln_pre_w'], p['ln_pre_b'])


def layer_apply(x, bp, *, n_head, l_real, bt):
    B, L, E = x.shape
    order = ['ln1_w', 'ln1_b', 'wqkv_t', 'bqkv', 'wo_t', 'bo',
             'ln2_w', 'ln2_b', 'w1_t', 'b1', 'w2_t', 'b2']
    weights = [bp[k] for k in order]
    return pl.pallas_call(
        functools.partial(layer_kernel, n_head=n_head, l_real=l_real),
        out_shape=jax.ShapeDtypeStruct((B, L, E), x.dtype),
        grid=(B // bt,),
        in_specs=[_act_spec(bt, L, E)] + [_weight_spec(w) for w in weights],
        out_specs=_act_spec(bt, L, E),
        input_output_aliases={0: 0},
        compiler_params=_compiler_params(),
    )(x, *weights)


def attn_apply(x, bp, *, n_head, l_real, bt):
    B, L, E = x.shape
    order = ['ln1_w', 'ln1_b', 'wqkv_t', 'bqkv', 'wo_t', 'bo']
    weights = [bp[k] for k in order]
    return pl.pallas_call(
        functools.partial(attn_block_kernel, n_head=n_head, l_real=l_real),
        out_shape=jax.ShapeDtypeStruct((B, L, E), x.dtype),
        grid=(B // bt,),
        in_specs=[_act_spec(bt, L, E)] + [_weight_spec(w) for w in weights],
        out_specs=_act_spec(bt, L, E),
        input_output_aliases={0: 0},
        compiler_params=_compiler_params(),
    )(x, *weights)


def mlp_apply(x, bp, *, bt):
    B, L, E = x.shape
    order = ['ln2_w', 'ln2_b', 'w1_t', 'b1', 'w2_t', 'b2']
    weights = [bp[k] for k in order]
    return pl.pallas_call(
        mlp_block_kernel,
        out_shape=jax.ShapeDtypeStruct((B, L, E), x.dtype),
        grid=(B // bt,),
        in_specs=[_act_spec(bt, L, E)] + [_weight_spec(w) for w in weights],
        out_specs=_act_spec(bt, L, E),
        input_output_aliases={0: 0},
        compiler_params=_compiler_params(),
    )(x, *weights)


def register_apply(x, infon, rp, *, bt):
    B, L, E = x.shape
    order = ['wlin_t', 'blin', 'ln2_w', 'ln2_b', 'wffn_t', 'bffn']
    weights = [rp[k] for k in order]
    return pl.pallas_call(
        register_kernel,
        out_shape=jax.ShapeDtypeStruct((B, L, E), x.dtype),
        grid=(B // bt,),
        in_specs=[_act_spec(bt, L, E), _weight_spec(infon)]
                 + [_weight_spec(w) for w in weights],
        out_specs=_act_spec(bt, L, E),
        input_output_aliases={0: 0},
        compiler_params=_compiler_params(),
    )(x, infon, *weights)


# -------------------------- plain-XLA (tiny) pieces ---------------------------

def register_info(share_info, rp):
    # Grid-invariant: base_down(store) || share_down(share_info), l2-normalized.
    base = jnp.dot(_bf16(rp['store']), rp['wbase_t'],
                   preferred_element_type=jnp.float32) + rp['bbase']
    share = jnp.dot(_bf16(share_info), rp['wshare_t'],
                    preferred_element_type=jnp.float32) + rp['bshare']
    info = jnp.concatenate([base, share], axis=-1)                   # (num, D)
    return _bf16(_l2norm(info))


def head_apply(x0, p):
    # Tiny (B,E)->(B,out) op: a dedicated grid=(1,) pallas_call is pure
    # launch/DMA overhead -- run ln_post + proj in plain XLA.
    xn = _layernorm(x0.astype(jnp.float32), p['ln_post_w'], p['ln_post_b'])
    return jnp.dot(_bf16(xn), p['proj'], preferred_element_type=jnp.float32)


def _extract_patches(x, p):
    # NCHW -> (B, num_patches, C*p*p) in the same (c, kh, kw) order as
    # conv_weight.reshape(width, -1), row-major over the spatial grid.
    B, C, H, W = x.shape
    x = x.reshape(B, C, H // p, p, W // p, p)
    x = x.transpose(0, 2, 4, 1, 3, 5)
    return x.reshape(B, (H // p) * (W // p), C * p * p)


# ------------------------------ full forward ----------------------------------

def vision_transformer_forward(x_img, share_info, params, *, patch, heads,
                               layers):
    patches = _extract_patches(x_img, patch)
    B, n_patches, _ = patches.shape
    l_real = n_patches + 1                         # CLS + patches
    l_pad = _round_up(l_real, 8)                   # sublane-aligned token axis
    E = params['pos'].shape[1]

    x = patch_embed(patches, params, l_pad=l_pad)  # (B, l_pad, E) bf16
    fused, bt_a, bt_m = _plan_layers(B, l_pad, E, heads, _vmem_limit_bytes())
    infon = register_info(share_info, params['register'])

    for i in range(layers):
        if i == layers // 2:                       # Register in the middle
            x = register_apply(x, infon, params['register'], bt=bt_a)
        bp = params['blocks'][i]
        if fused:
            x = layer_apply(x, bp, n_head=heads, l_real=l_real, bt=bt_a)
        else:
            x = attn_apply(x, bp, n_head=heads, l_real=l_real, bt=bt_a)
            x = mlp_apply(x, bp, bt=bt_m)
    x0 = x[:, 0, :]                                # CLS token (unaffected by pad)
    return head_apply(x0, params)                  # ln_post + proj


# ------------------------------ parameter init --------------------------------

def _init_params(key, *, in_ch, patch, n_patches, width, layers, heads,
                 out_dim, reg_num, share_dim):
    K = in_ch * patch * patch
    L = n_patches + 1
    E = width
    D = width                      # Register: in_dim == dim == width
    hd = E // heads
    it = iter(jax.random.split(key, 32 + 16 * layers))

    def nxt():
        return next(it)

    def w32(shape, fan_in):        # kaiming-normal-like
        return jax.random.normal(nxt(), shape, jnp.float32) * (2.0 / fan_in) ** 0.5

    def wbf(shape, fan_in):        # matmul weights stored bf16 for the MXU
        return w32(shape, fan_in).astype(jnp.bfloat16)

    def zeros(shape):
        return jnp.zeros(shape, jnp.float32)

    def ones(shape):
        return jnp.ones(shape, jnp.float32)

    scale = E ** -0.5
    params = {
        'conv_w_t': wbf((K, E), K),
        'cls': scale * jax.random.normal(nxt(), (1, E), jnp.float32),
        'pos': scale * jax.random.normal(nxt(), (L, E), jnp.float32),
        'ln_pre_w': ones((1, E)), 'ln_pre_b': zeros((1, E)),
        'ln_post_w': ones((1, E)), 'ln_post_b': zeros((1, E)),
        'proj': (scale * jax.random.normal(nxt(), (E, out_dim), jnp.float32)
                 ).astype(jnp.bfloat16),
    }
    q_scale = hd ** -0.5
    blocks = []
    for _ in range(layers):
        wq, wk, wv = w32((E, E), E), w32((E, E), E), w32((E, E), E)
        bq, bk, bv = zeros((1, E)), zeros((1, E)), zeros((1, E))
        # Fused QKV weight; 1/sqrt(head_dim) folded into the q columns/bias.
        wqkv = jnp.concatenate([wq * q_scale, wk, wv], axis=1).astype(jnp.bfloat16)
        bqkv = jnp.concatenate([bq * q_scale, bk, bv], axis=1)
        blocks.append({
            'ln1_w': ones((1, E)), 'ln1_b': zeros((1, E)),
            'wqkv_t': wqkv, 'bqkv': bqkv,
            'wo_t': wbf((E, E), E), 'bo': zeros((1, E)),
            'ln2_w': ones((1, E)), 'ln2_b': zeros((1, E)),
            'w1_t': wbf((E, 4 * E), E), 'b1': zeros((1, 4 * E)),
            'w2_t': wbf((4 * E, E), 4 * E), 'b2': zeros((1, E)),
        })
    params['blocks'] = blocks
    params['register'] = {
        'store': jax.random.normal(nxt(), (reg_num, D), jnp.float32),
        'wlin_t': wbf((E, D), E), 'blin': zeros((1, D)),
        'wbase_t': wbf((D, D - share_dim), D), 'bbase': zeros((1, D - share_dim)),
        'wshare_t': wbf((D, share_dim), D), 'bshare': zeros((1, share_dim)),
        'ln2_w': ones((1, D)), 'ln2_b': zeros((1, D)),
        'wffn_t': wbf((D, E), D), 'bffn': zeros((1, E)),
    }
    return params


# ------------------------------------ main ------------------------------------

if __name__ == "__main__":
    B, C, RES, PATCH = 2, 3, 16, 8
    WIDTH, LAYERS, HEADS, OUT_DIM = 32, 2, 4, 16
    REG_NUM, SHARE_DIM = 8, 16
    n_patches = (RES // PATCH) ** 2

    key = jax.random.PRNGKey(0)
    k_img, k_share, k_par = jax.random.split(key, 3)
    x_img = jax.random.normal(k_img, (B, C, RES, RES), jnp.float32)
    share_info = jax.random.normal(k_share, (REG_NUM, WIDTH), jnp.float32)
    params = _init_params(k_par, in_ch=C, patch=PATCH, n_patches=n_patches,
                          width=WIDTH, layers=LAYERS, heads=HEADS,
                          out_dim=OUT_DIM, reg_num=REG_NUM, share_dim=SHARE_DIM)

    out = vision_transformer_forward(x_img, share_info, params,
                                     patch=PATCH, heads=HEADS, layers=LAYERS)
    out = jax.block_until_ready(out)
    assert out.shape == (B, OUT_DIM)
    assert bool(jnp.all(jnp.isfinite(out)))
    print("KERNEL_OK")
</pallas_src>

<mosaic_0001>
module attributes {stable_mosaic.version = 11 : i64} {
  func.func @probe(%arg0: i32, %arg1: memref<8x128xf32, #tpu.memory_space<vmem>>, %arg2: memref<1x8x128xf32, #tpu.memory_space<vmem>>, %arg3: memref<1x8x128xf32, #tpu.memory_space<vmem>>) attributes {dimension_semantics = [#tpu.dimension_semantics<arbitrary>], iteration_bounds = array<i64: 2>, scalar_prefetch = 0 : i64, scratch_operands = 0 : i64, tpu.core_type = #tpu.core_type<tc>, window_params = [{pipeline_mode = #tpu.pipeline_mode<synchronous>, transform_indices = @transform_0, window_bounds = array<i64: 8, 128>}, {transform_indices = @transform_1, window_bounds = array<i64: 1, 8, 128>}, {transform_indices = @transform_2, window_bounds = array<i64: 1, 8, 128>}]} {
    %c0 = arith.constant 0 : index
    %c0_0 = arith.constant 0 : index
    %c0_1 = arith.constant 0 : index
    %0 = vector.load %arg2[%c0, %c0_0, %c0_1] : memref<1x8x128xf32, #tpu.memory_space<vmem>>, vector<1x8x128xf32>
    %c0_2 = arith.constant 0 : index
    %c0_3 = arith.constant 0 : index
    %1 = vector.load %arg1[%c0_2, %c0_3] : memref<8x128xf32, #tpu.memory_space<vmem>>, vector<8x128xf32>
    %2 = vector.shape_cast %1 : vector<8x128xf32> to vector<1x8x128xf32>
    %3 = arith.addf %0, %2 : vector<1x8x128xf32>
    %c0_4 = arith.constant 0 : index
    %c0_5 = arith.constant 0 : index
    %c0_6 = arith.constant 0 : index
    %4 = vector.load %arg3[%c0_4, %c0_5, %c0_6] : memref<1x8x128xf32, #tpu.memory_space<vmem>>, vector<1x8x128xf32>
    tpu.vector_store %arg3[%c0_4, %c0_5, %c0_6], %3 {strides = array<i32>} : memref<1x8x128xf32, #tpu.memory_space<vmem>>, vector<1x8x128xf32>,
    return
  }
  func.func @transform_0(%arg0: i32) -> (i32, i32) {
    %c0_i32 = arith.constant 0 : i32
    %c0_i32_0 = arith.constant 0 : i32
    %c0_i32_1 = arith.constant 0 : i32
    return %c0_i32, %c0_i32_0 : i32, i32
  }
  func.func @transform_1(%arg0: i32) -> (i32, i32, i32) {
    %c0_i32 = arith.constant 0 : i32
    %c0_i32_0 = arith.constant 0 : i32
    %c0_i32_1 = arith.constant 0 : i32
    return %arg0, %c0_i32, %c0_i32_0 : i32, i32, i32
  }
  func.func @transform_2(%arg0: i32) -> (i32, i32, i32) {
    %c0_i32 = arith.constant 0 : i32
    %c0_i32_0 = arith.constant 0 : i32
    %c0_i32_1 = arith.constant 0 : i32
    return %arg0, %c0_i32, %c0_i32_0 : i32, i32, i32
  }
}

module attributes {stable_mosaic.version = 11 : i64} {
  func.func @patch_embed_kernel(%arg0: i32, %arg1: memref<1x4x192xf32, #tpu.memory_space<vmem>>, %arg2: memref<192x32xbf16, #tpu.memory_space<vmem>>, %arg3: memref<1x32xf32, #tpu.memory_space<vmem>>, %arg4: memref<5x32xf32, #tpu.memory_space<vmem>>, %arg5: memref<1x32xf32, #tpu.memory_space<vmem>>, %arg6: memref<1x32xf32, #tpu.memory_space<vmem>>, %arg7: memref<1x8x32xbf16, #tpu.memory_space<vmem>>) attributes {dimension_semantics = [#tpu.dimension_semantics<parallel>], iteration_bounds = array<i64: 2>, scalar_prefetch = 0 : i64, scratch_operands = 0 : i64, tpu.core_type = #tpu.core_type<tc>, window_params = [{transform_indices = @transform_0, window_bounds = array<i64: 1, 4, 192>}, {pipeline_mode = #tpu.pipeline_mode<synchronous>, transform_indices = @transform_1, window_bounds = array<i64: 192, 32>}, {pipeline_mode = #tpu.pipeline_mode<synchronous>, transform_indices = @transform_2, window_bounds = array<i64: 1, 32>}, {pipeline_mode = #tpu.pipeline_mode<synchronous>, transform_indices = @transform_3, window_bounds = array<i64: 5, 32>}, {pipeline_mode = #tpu.pipeline_mode<synchronous>, transform_indices = @transform_4, window_bounds = array<i64: 1, 32>}, {pipeline_mode = #tpu.pipeline_mode<synchronous>, transform_indices = @transform_5, window_bounds = array<i64: 1, 32>}, {transform_indices = @transform_6, window_bounds = array<i64: 1, 8, 32>}]} {
    %c0 = arith.constant 0 : index
    %c0_0 = arith.constant 0 : index
    %c0_1 = arith.constant 0 : index
    %0 = vector.load %arg1[%c0, %c0_0, %c0_1] : memref<1x4x192xf32, #tpu.memory_space<vmem>>, vector<1x4x192xf32>
    %1 = vector.shape_cast %0 : vector<1x4x192xf32> to vector<4x192xf32>
    %2 = arith.truncf %1 : vector<4x192xf32> to vector<4x192xbf16>
    %c0_2 = arith.constant 0 : index
    %c0_3 = arith.constant 0 : index
    %3 = vector.load %arg2[%c0_2, %c0_3] : memref<192x32xbf16, #tpu.memory_space<vmem>>, vector<192x32xbf16>
    %cst = arith.constant dense<0.000000e+00> : vector<4x32xf32>
    %4 = tpu.matmul %2, %3, %cst {dimension_numbers = #tpu.dot_dimension_numbers<[1], [0], [0], [1], [0, 0, 1, 1], [], []>} : vector<4x192xbf16>, vector<192x32xbf16>, vector<4x32xf32> -> vector<4x32xf32>
    %c0_4 = arith.constant 0 : index
    %c0_5 = arith.constant 0 : index
    %5 = vector.load %arg3[%c0_4, %c0_5] : memref<1x32xf32, #tpu.memory_space<vmem>>, vector<1x32xf32>
    %6 = tpu.concatenate %5, %4 in 0 : vector<1x32xf32>, vector<4x32xf32> -> vector<5x32xf32>
    %c0_6 = arith.constant 0 : index
    %c0_7 = arith.constant 0 : index
    %7 = vector.load %arg4[%c0_6, %c0_7] : memref<5x32xf32, #tpu.memory_space<vmem>>, vector<5x32xf32>
    %8 = arith.addf %6, %7 : vector<5x32xf32>
    %c0_8 = arith.constant 0 : index
    %c0_9 = arith.constant 0 : index
    %9 = vector.load %arg5[%c0_8, %c0_9] : memref<1x32xf32, #tpu.memory_space<vmem>>, vector<1x32xf32>
    %c0_10 = arith.constant 0 : index
    %c0_11 = arith.constant 0 : index
    %10 = vector.load %arg6[%c0_10, %c0_11] : memref<1x32xf32, #tpu.memory_space<vmem>>, vector<1x32xf32>
    %cst_12 = arith.constant dense<0.000000e+00> : vector<5xf32>
    %11 = vector.multi_reduction <add>, %8, %cst_12 [1] : vector<5x32xf32> to vector<5xf32>
    %12 = vector.shape_cast %11 : vector<5xf32> to vector<5x1xf32>
    %cst_13 = arith.constant 3.200000e+01 : f32
    %13 = vector.broadcast %cst_13 : f32 to vector<5x1xf32>
    %14 = arith.divf %12, %13 : vector<5x1xf32>
    %15 = vector.broadcast %14 : vector<5x1xf32> to vector<5x32xf32>
    %16 = arith.subf %8, %15 : vector<5x32xf32>
    %17 = arith.mulf %16, %16 : vector<5x32xf32>
    %cst_14 = arith.constant dense<0.000000e+00> : vector<5xf32>
    %18 = vector.multi_reduction <add>, %17, %cst_14 [1] : vector<5x32xf32> to vector<5xf32>
    %19 = vector.shape_cast %18 : vector<5xf32> to vector<5x1xf32>
    %cst_15 = arith.constant 3.200000e+01 : f32
    %20 = vector.broadcast %cst_15 : f32 to vector<5x1xf32>
    %21 = arith.divf %19, %20 : vector<5x1xf32>
    %22 = vector.broadcast %14 : vector<5x1xf32> to vector<5x32xf32>
    %23 = arith.subf %8, %22 : vector<5x32xf32>
    %cst_16 = arith.constant 9.99999974E-6 : f32
    %24 = vector.broadcast %cst_16 : f32 to vector<5x1xf32>
    %25 = arith.addf %21, %24 : vector<5x1xf32>
    %26 = math.rsqrt %25 : vector<5x1xf32>
    %27 = vector.broadcast %26 : vector<5x1xf32> to vector<5x32xf32>
    %28 = arith.mulf %23, %27 : vector<5x32xf32>
    %29 = vector.broadcast %9 : vector<1x32xf32> to vector<5x32xf32>
    %30 = arith.mulf %28, %29 : vector<5x32xf32>
    %31 = vector.broadcast %10 : vector<1x32xf32> to vector<5x32xf32>
    %32 = arith.addf %30, %31 : vector<5x32xf32>
    %cst_17 = arith.constant 0.000000e+00 : f32
    %33 = vector.broadcast %cst_17 : f32 to vector<3x32xf32>
    %34 = tpu.concatenate %32, %33 in 0 : vector<5x32xf32>, vector<3x32xf32> -> vector<8x32xf32>
    %35 = arith.truncf %34 : vector<8x32xf32> to vector<8x32xbf16>
    %c0_18 = arith.constant 0 : index
    %c0_19 = arith.constant 0 : index
    %c0_20 = arith.constant 0 : index
    %36 = vector.load %arg7[%c0_18, %c0_19, %c0_20] : memref<1x8x32xbf16, #tpu.memory_space<vmem>>, vector<1x8x32xbf16>
    %37 = vector.shape_cast %36 : vector<1x8x32xbf16> to vector<8x32xbf16>
    %38 = vector.shape_cast %35 : vector<8x32xbf16> to vector<1x8x32xbf16>
    tpu.vector_store %arg7[%c0_18, %c0_19, %c0_20], %38 {strides = array<i32>} : memref<1x8x32xbf16, #tpu.memory_space<vmem>>, vector<1x8x32xbf16>,
    return
  }
  func.func @transform_0(%arg0: i32) -> (i32, i32, i32) {
    %c0_i32 = arith.constant 0 : i32
    %c0_i32_0 = arith.constant 0 : i32
    %c0_i32_1 = arith.constant 0 : i32
    return %arg0, %c0_i32, %c0_i32_0 : i32, i32, i32
  }
  func.func @transform_1(%arg0: i32) -> (i32, i32) {
    %c0_i32 = arith.constant 0 : i32
    %c0_i32_0 = arith.constant 0 : i32
    %c0_i32_1 = arith.constant 0 : i32
    return %c0_i32, %c0_i32_0 : i32, i32
  }
  func.func @transform_2(%arg0: i32) -> (i32, i32) {
    %c0_i32 = arith.constant 0 : i32
    %c0_i32_0 = arith.constant 0 : i32
    %c0_i32_1 = arith.constant 0 : i32
    return %c0_i32, %c0_i32_0 : i32, i32
  }
  func.func @transform_3(%arg0: i32) -> (i32, i32) {
    %c0_i32 = arith.constant 0 : i32
    %c0_i32_0 = arith.constant 0 : i32
    %c0_i32_1 = arith.constant 0 : i32
    return %c0_i32, %c0_i32_0 : i32, i32
  }
  func.func @transform_4(%arg0: i32) -> (i32, i32) {
    %c0_i32 = arith.constant 0 : i32
    %c0_i32_0 = arith.constant 0 : i32
    %c0_i32_1 = arith.constant 0 : i32
    return %c0_i32, %c0_i32_0 : i32, i32
  }
  func.func @transform_5(%arg0: i32) -> (i32, i32) {
    %c0_i32 = arith.constant 0 : i32
    %c0_i32_0 = arith.constant 0 : i32
    %c0_i32_1 = arith.constant 0 : i32
    return %c0_i32, %c0_i32_0 : i32, i32
  }
  func.func @transform_6(%arg0: i32) -> (i32, i32, i32) {
    %c0_i32 = arith.constant 0 : i32
    %c0_i32_0 = arith.constant 0 : i32
    %c0_i32_1 = arith.constant 0 : i32
    return %arg0, %c0_i32, %c0_i32_0 : i32, i32, i32
  }
}

</mosaic_0001>

<llo_original>
// kernel: tpu_custom_call.1
$region0: #{tpu_custom_call.1}
  #allocation0 [shape = 'u32[]', space=smem, size = 0x4, offset = 0x4, fixed_abs, tag = 'smem constant byte address 0x4 - core index']
  #allocation1 [shape = 'u32[144,128]{1,0:T(1,128)}', space=vmem, size = 0x12000, scoped, tag = 'internal scratch']
  %s0 = inlined_call_operand.hbm [shape: f32[8,128], index: 0, kind: input, shape index: {}]
  %s1 = inlined_call_operand.hbm [shape: f32[2,8,128], index: 1, kind: input, shape index: {}]
  %s2 = inlined_call_operand.hbm [shape: f32[2,8,128], index: 2, kind: output, shape index: {}]
  %s3 = sld [smem:[#allocation0]]
  $region49: #{tpu_custom_call.1} parent=0
    _
  %s5 = ssub.s32 1, %s3
  %s6 = scalar_select 0, %s5, %s3
  $region1: #{tpu_custom_call.1} parent=0
    #allocation2 [shape = 'u8[4096]{0}', space=vmem, size = 0x1000, scoped, tag = 'input window, operand 0, single buffered']
    #allocation3 [shape = 's32[2]{0}', space=sflag, size = 0x8, scoped, tag = 'scoped memory for tpu_custom_call.1']
    #allocation4 [shape = 's32[2]{0}', space=sflag, size = 0x8, scoped, tag = 'scoped memory for tpu_custom_call.1']
    #allocation5 [shape = 'u8[8192]{0}', space=vmem, size = 0x2000, scoped, tag = 'input window, operand 1']
    #allocation6 [shape = 's32[2]{0}', space=sflag, size = 0x8, scoped, tag = 'scoped memory for tpu_custom_call.1']
    #allocation7 [shape = 'u8[8192]{0}', space=vmem, size = 0x2000, scoped, tag = 'output window, operand 0']
    %7 = vsyncpa [#allocation3], 0
    %8 = vsyncpa [#allocation6], 0
    %s9 = scalar_lea.sflag [#allocation6], 1
    %10 = vsyncpa %s9, 0
    %11 = vsyncpa [#allocation4], 0
    %s12 = scalar_lea.sflag [#allocation4], 1
    %13 = vsyncpa %s12, 0
    loop: start=0, step=1, limit=4
    $region2: #{tpu_custom_call.1} parent=1 // loop_pre_header
      _
    $region3: #{tpu_custom_call.1} parent=1 // loop_header
      %s15 = sphi 0, %s19
      %p16 = scmp.ge.s32.totalorder %s15, 4
      %s23 = sphi 0, %s23
      %s25 = sphi 0, %s23
      %s26 = sphi 0, %s25
      %s40 = sphi 0, %s26
      %s46 = sphi 0, %s48
      %s49 = sphi 0, %s46
      %s50 = sphi 0, %s49
      %s66 = sphi 0, %s50
      %s72 = sphi 0, %s74
      %s75 = sphi 0, %s72
      %s76 = sphi 0, %s75
      %s92 = sphi 0, %s76
    $region4: #{tpu_custom_call.1} parent=1 // loop_header_branch
      %18 = sbr.rel (%p16) target = $region8
    $region5: #{tpu_custom_call.1} parent=1 // loop_body
      %s20 = ssub.s32 %s15, 1
      %s21 = ssub.s32 %s15, 2
      %s22 = sadd.s32 %s15, 1
      %s24 = sadd.s32 %s23, 1
      %p27 = scmp.eq.s32.totalorder %s15, 1
      %p28 = scmp.ne.s32.totalorder %s23, %s25
      %p29 = scmp.eq.s32.totalorder %s15, 0
      %p30 = por %p28, %p29
      %p31 = scmp.ne.s32.totalorder %s23, %s25
      %p32 = scmp.eq.s32.totalorder %s20, 1
      %p33 = por %p31, %p32
      %p34 = scmp.ne.s32.totalorder %s25, %s26
      %p35 = scmp.eq.s32.totalorder %s20, 0
      %p36 = por %p34, %p35
      %p37 = scmp.ne.s32.totalorder %s25, %s26
      %p38 = scmp.eq.s32.totalorder %s21, 1
      %p39 = por %p37, %p38
      %p41 = scmp.ne.s32.totalorder %s26, %s40
      %p42 = scmp.eq.s32.totalorder %s21, 0
      %p43 = por %p41, %p42
      %s44 = ssub.s32 %s15, %s22
      %p45 = scmp.eq.s32.totalorder %s44, 0
      %s47 = sadd.s32 %s46, 1
      %s48 = scalar_select %p45, %s46, %s47
      %p51 = pneg %p45
      %p52 = scmp.eq.s32.totalorder %s15, 1
      %p53 = por %p51, %p52
      %p54 = scmp.ne.s32.totalorder %s46, %s49
      %p55 = scmp.eq.s32.totalorder %s15, 0
      %p56 = por %p54, %p55
      %p57 = scmp.ne.s32.totalorder %s46, %s49
      %p58 = scmp.eq.s32.totalorder %s20, 1
      %p59 = por %p57, %p58
      %p60 = scmp.ne.s32.totalorder %s49, %s50
      %p61 = scmp.eq.s32.totalorder %s20, 0
      %p62 = por %p60, %p61
      %p63 = scmp.ne.s32.totalorder %s49, %s50
      %p64 = scmp.eq.s32.totalorder %s21, 1
      %p65 = por %p63, %p64
      %p67 = scmp.ne.s32.totalorder %s50, %s66
      %p68 = scmp.eq.s32.totalorder %s21, 0
      %p69 = por %p67, %p68
      %s70 = ssub.s32 %s15, %s22
      %p71 = scmp.eq.s32.totalorder %s70, 0
      %s73 = sadd.s32 %s72, 1
      %s74 = scalar_select %p71, %s72, %s73
      %p77 = pneg %p71
      %p78 = scmp.eq.s32.totalorder %s15, 1
      %p79 = por %p77, %p78
      %p80 = scmp.ne.s32.totalorder %s72, %s75
      %p81 = scmp.eq.s32.totalorder %s15, 0
      %p82 = por %p80, %p81
      %p83 = scmp.ne.s32.totalorder %s72, %s75
      %p84 = scmp.eq.s32.totalorder %s20, 1
      %p85 = por %p83, %p84
      %p86 = scmp.ne.s32.totalorder %s75, %s76
      %p87 = scmp.eq.s32.totalorder %s20, 0
      %p88 = por %p86, %p87
      %p89 = scmp.ne.s32.totalorder %s75, %s76
      %p90 = scmp.eq.s32.totalorder %s21, 1
      %p91 = por %p89, %p90
      %p93 = scmp.ne.s32.totalorder %s76, %s92
      %p94 = scmp.eq.s32.totalorder %s21, 0
      %p95 = por %p93, %p94
      %p96 = scmp.le.s32.totalorder 1, %s15
      %p97 = scmp.lt.s32.totalorder %s15, 3
      %p98 = pnand %p96, %p97
      %p99 = pneg %p98
      // Predicated region
      $region9: #{tpu_custom_call.1} parent=5 // pred_check
        _
      $region10: #{tpu_custom_call.1} parent=5 // pred_check_branch
        %101 = sbr.rel (%p98) target = $region12
      $region11: #{tpu_custom_call.1} parent=5 // pred_region
        %s102 = ssub.s32 %s15, 1
        // Predicated region
        $region13: #{tpu_custom_call.1} parent=11 // pred_check
          %p103 = pneg %p36
        $region14: #{tpu_custom_call.1} parent=11 // pred_check_branch
          %105 = sbr.rel (%p103) target = $region16
        $region15: #{tpu_custom_call.1} parent=11 // pred_region
          %s107 = ssub.s32 128, 128
          %108 = vsyncadd [#allocation3], %s107
          %s110 = sshll.u32 [#allocation2], 4
          %s111 = int_to_ptr.vmem [resolvable:$true] %s110
          %113 = dma.hbm_to_vmem [thread:$0]  %s0, 128, %s111, [#allocation3]
        $region16: #{tpu_custom_call.1} parent=11 // pred_fallthru
          _
      $region12: #{tpu_custom_call.1} parent=5 // pred_fallthru
        _
      %p114 = scmp.lt.s32.totalorder %s15, 2
      // Predicated region
      $region17: #{tpu_custom_call.1} parent=5 // pred_check
        %p115 = pneg %p114
      $region18: #{tpu_custom_call.1} parent=5 // pred_check_branch
        %117 = sbr.rel (%p115) target = $region20
      $region19: #{tpu_custom_call.1} parent=5 // pred_region
        // Predicated region
        $region21: #{tpu_custom_call.1} parent=19 // pred_check
          %p118 = pneg %p56
        $region22: #{tpu_custom_call.1} parent=19 // pred_check_branch
          %120 = sbr.rel (%p118) target = $region24
        $region23: #{tpu_custom_call.1} parent=19 // pred_region
          %s121 = sand.u32 %s46, 1
          %s122 = scalar_lea.sflag [#allocation6], %s121
          %s123 = sand.u32 %s46, 1
          %s124 = smul.addr %s123, 8
          %s125 = scalar_lea.vmem [#allocation5], %s124
          %s127 = ssub.s32 128, 128
          %128 = vsyncadd %s122, %s127
          %s129 = smul.addr %s15, 128
          %s130 = scalar_lea.hbm %s1, %s129
          %s132 = sshll.u32 %s125, 4
          %s133 = int_to_ptr.vmem [resolvable:$true] %s132
          %135 = dma.hbm_to_vmem [thread:$0]  %s130, 128, %s133, %s122
        $region24: #{tpu_custom_call.1} parent=19 // pred_fallthru
          _
      $region20: #{tpu_custom_call.1} parent=5 // pred_fallthru
        _
      %p136 = scmp.le.s32.totalorder 1, %s15
      %p137 = scmp.lt.s32.totalorder %s15, 3
      %p138 = pnand %p136, %p137
      %p139 = pneg %p138
      // Predicated region
      $region25: #{tpu_custom_call.1} parent=5 // pred_check
        _
      $region26: #{tpu_custom_call.1} parent=5 // pred_check_branch
        %141 = sbr.rel (%p138) target = $region28
      $region27: #{tpu_custom_call.1} parent=5 // pred_region
        %s142 = ssub.s32 %s15, 1
        // Predicated region
        $region29: #{tpu_custom_call.1} parent=27 // pred_check
          %p143 = pneg %p36
        $region30: #{tpu_custom_call.1} parent=27 // pred_check_branch
          %145 = sbr.rel (%p143) target = $region32
        $region31: #{tpu_custom_call.1} parent=27 // pred_region
          %146 = dma.done [#allocation3], 128
        $region32: #{tpu_custom_call.1} parent=27 // pred_fallthru
          _
        %s147 = sand.u32 %s49, 1
        %s148 = scalar_lea.sflag [#allocation6], %s147
        %s149 = sand.u32 %s49, 1
        %s150 = smul.addr %s149, 8
        %s151 = scalar_lea.vmem [#allocation5], %s150
        // Predicated region
        $region33: #{tpu_custom_call.1} parent=27 // pred_check
          %p152 = pneg %p62
        $region34: #{tpu_custom_call.1} parent=27 // pred_check_branch
          %154 = sbr.rel (%p152) target = $region36
        $region35: #{tpu_custom_call.1} parent=27 // pred_region
          %155 = dma.done %s148, 128
        $region36: #{tpu_custom_call.1} parent=27 // pred_fallthru
          _
        %p156 = pneg %p36
        %p157 = pneg %p33
        %s158 = sand.u32 %s49, 1
        %s159 = scalar_lea.sflag [#allocation6], %s158
        %s160 = sand.u32 %s49, 1
        %s161 = smul.addr %s160, 8
        %s162 = scalar_lea.vmem [#allocation5], %s161
        %p163 = pneg %p62
        %p164 = pneg %p59
        %p165 = pneg %p88
        %p166 = pneg %p85
        %s167 = sand.u32 %s75, 1
        %s168 = scalar_lea.sflag [#allocation4], %s167
        %s169 = sand.u32 %s75, 1
        %s170 = smul.addr %s169, 8
        %s171 = scalar_lea.vmem [#allocation7], %s170
        %v172 = vld [vmem:[%s151] sm:$0xff]
        %v173 = vld [vmem:[#allocation2] sm:$0xff]
        %v174 = vadd.f32 %v172, %v173
        %175 = vst [vmem:[%s171] sm:$0xff] %v174
        %s176 = sand.u32 %s75, 1
        %s177 = scalar_lea.sflag [#allocation4], %s176
        %s178 = sand.u32 %s75, 1
        %s179 = smul.addr %s178, 8
        %s180 = scalar_lea.vmem [#allocation7], %s179
        // Predicated region
        $region37: #{tpu_custom_call.1} parent=27 // pred_check
          %p181 = pneg %p85
        $region38: #{tpu_custom_call.1} parent=27 // pred_check_branch
          %183 = sbr.rel (%p181) target = $region40
        $region39: #{tpu_custom_call.1} parent=27 // pred_region
          %s185 = ssub.s32 128, 128
          %186 = vsyncadd %s177, %s185
          %s187 = smul.addr %s20, 128
          %s188 = scalar_lea.hbm %s2, %s187
          %s190 = sshll.u32 %s180, 4
          %s191 = int_to_ptr.vmem [resolvable:$true] %s190
          %193 = dma.vmem_to_hbm [thread:$0]  %s191, 128, %s188, %s177
        $region40: #{tpu_custom_call.1} parent=27 // pred_fallthru
          _
      $region28: #{tpu_custom_call.1} parent=5 // pred_fallthru
        _
      %p194 = scmp.le.s32.totalorder 2, %s15
      // Predicated region
      $region41: #{tpu_custom_call.1} parent=5 // pred_check
        %p195 = pneg %p194
      $region42: #{tpu_custom_call.1} parent=5 // pred_check_branch
        %197 = sbr.rel (%p195) target = $region44
      $region43: #{tpu_custom_call.1} parent=5 // pred_region
        %s198 = ssub.s32 %s15, 2
        // Predicated region
        $region45: #{tpu_custom_call.1} parent=43 // pred_check
          %p199 = pneg %p91
        $region46: #{tpu_custom_call.1} parent=43 // pred_check_branch
          %201 = sbr.rel (%p199) target = $region48
        $region47: #{tpu_custom_call.1} parent=43 // pred_region
          %s202 = sand.u32 %s76, 1
          %s203 = scalar_lea.sflag [#allocation4], %s202
          %s204 = sand.u32 %s76, 1
          %s205 = smul.addr %s204, 8
          %s206 = scalar_lea.vmem [#allocation7], %s205
          %207 = dma.done %s203, 128
        $region48: #{tpu_custom_call.1} parent=43 // pred_fallthru
          _
      $region44: #{tpu_custom_call.1} parent=5 // pred_fallthru
        _
    $region6: #{tpu_custom_call.1} parent=1 // loop_footer
      %s19 = sadd.s32 1, %s15
    $region7: #{tpu_custom_call.1} parent=1 // loop_footer_branch
      %14 = sbr.rel target = $region3
    $region8: #{tpu_custom_call.1} parent=1 // loop_exit
      _
    %208 = vsyncpa [#allocation3], 1
    %s209 = scalar_lea.sflag [#allocation3], 1
    %210 = vsyncpa %s209, 1
    %211 = vsyncpa [#allocation6], 1
    %s212 = scalar_lea.sflag [#allocation6], 1
    %213 = vsyncpa %s212, 1
    %214 = vsyncpa [#allocation4], 1
    %s215 = scalar_lea.sflag [#allocation4], 1
    %216 = vsyncpa %s215, 1

// kernel: tpu_custom_call.1
$region0: #{tpu_custom_call.1}
  #allocation0 [shape = 'u32[]', space=smem, size = 0x4, offset = 0x4, fixed_abs, tag = 'smem constant byte address 0x4 - core index']
  #allocation1 [shape = 'u32[144,128]{1,0:T(1,128)}', space=vmem, size = 0x12000, scoped, tag = 'internal scratch']
  %s0 = inlined_call_operand.vmem [shape: f32[2,4,192], index: 0, kind: input, shape index: {}]
  %s1 = inlined_call_operand.vmem [shape: bf16[192,32], index: 1, kind: input, shape index: {}]
  %s2 = inlined_call_operand.vmem [shape: f32[1,32], index: 2, kind: input, shape index: {}]
  %s3 = inlined_call_operand.vmem [shape: f32[5,32], index: 3, kind: input, shape index: {}]
  %s4 = inlined_call_operand.vmem [shape: f32[1,32], index: 4, kind: input, shape index: {}]
  %s5 = inlined_call_operand.vmem [shape: f32[1,32], index: 5, kind: input, shape index: {}]
  %s6 = inlined_call_operand.hbm [shape: bf16[2,8,32], index: 6, kind: output, shape index: {}]
  %s7 = sld [smem:[#allocation0]]
  $region57: #{tpu_custom_call.1} parent=0
    _
  %s9 = ssub.s32 1, %s7
  %s10 = scalar_select 0, %s9, %s7
  $region1: #{tpu_custom_call.1} parent=0
    #allocation2 [shape = 'u8[4096]{0}', space=vmem, size = 0x1000, scoped, tag = 'output window, operand 0']
    #allocation3 [shape = 's32[2]{0}', space=sflag, size = 0x8, scoped, tag = 'scoped memory for tpu_custom_call.1']
    %11 = vsyncpa [#allocation3], 0
    %s12 = scalar_lea.sflag [#allocation3], 1
    %13 = vsyncpa %s12, 0
    loop: start=0, step=1, limit=4
    $region2: #{tpu_custom_call.1} parent=1 // loop_pre_header
      _
    $region3: #{tpu_custom_call.1} parent=1 // loop_header
      %s15 = sphi 0, %s19
      %p16 = scmp.ge.s32.totalorder %s15, 4
      %s25 = sphi 0, %s27
      %s28 = sphi 0, %s25
      %s29 = sphi 0, %s28
      %s45 = sphi 0, %s29
      %s49 = sphi 0, %s49
      %s51 = sphi 0, %s49
      %s52 = sphi 0, %s51
      %s66 = sphi 0, %s52
      %s70 = sphi 0, %s70
      %s72 = sphi 0, %s70
      %s73 = sphi 0, %s72
      %s87 = sphi 0, %s73
      %s91 = sphi 0, %s91
      %s93 = sphi 0, %s91
      %s94 = sphi 0, %s93
      %s108 = sphi 0, %s94
      %s112 = sphi 0, %s112
      %s114 = sphi 0, %s112
      %s115 = sphi 0, %s114
      %s129 = sphi 0, %s115
      %s133 = sphi 0, %s133
      %s135 = sphi 0, %s133
      %s136 = sphi 0, %s135
      %s150 = sphi 0, %s136
      %s156 = sphi 0, %s158
      %s159 = sphi 0, %s156
      %s160 = sphi 0, %s159
      %s176 = sphi 0, %s160
    $region4: #{tpu_custom_call.1} parent=1 // loop_header_branch
      %18 = sbr.rel (%p16) target = $region8
    $region5: #{tpu_custom_call.1} parent=1 // loop_body
      %s20 = ssub.s32 %s15, 1
      %s21 = ssub.s32 %s15, 2
      %s22 = sadd.s32 %s15, 1
      %s23 = ssub.s32 %s15, %s22
      %p24 = scmp.eq.s32.totalorder %s23, 0
      %s26 = sadd.s32 %s25, 1
      %s27 = scalar_select %p24, %s25, %s26
      %p30 = pneg %p24
      %p31 = scmp.eq.s32.totalorder %s15, 1
      %p32 = por %p30, %p31
      %p33 = scmp.ne.s32.totalorder %s25, %s28
      %p34 = scmp.eq.s32.totalorder %s15, 0
      %p35 = por %p33, %p34
      %p36 = scmp.ne.s32.totalorder %s25, %s28
      %p37 = scmp.eq.s32.totalorder %s20, 1
      %p38 = por %p36, %p37
      %p39 = scmp.ne.s32.totalorder %s28, %s29
      %p40 = scmp.eq.s32.totalorder %s20, 0
      %p41 = por %p39, %p40
      %p42 = scmp.ne.s32.totalorder %s28, %s29
      %p43 = scmp.eq.s32.totalorder %s21, 1
      %p44 = por %p42, %p43
      %p46 = scmp.ne.s32.totalorder %s29, %s45
      %p47 = scmp.eq.s32.totalorder %s21, 0
      %p48 = por %p46, %p47
      %s50 = sadd.s32 %s49, 1
      %p53 = scmp.eq.s32.totalorder %s15, 1
      %p54 = scmp.ne.s32.totalorder %s49, %s51
      %p55 = scmp.eq.s32.totalorder %s15, 0
      %p56 = por %p54, %p55
      %p57 = scmp.ne.s32.totalorder %s49, %s51
      %p58 = scmp.eq.s32.totalorder %s20, 1
      %p59 = por %p57, %p58
      %p60 = scmp.ne.s32.totalorder %s51, %s52
      %p61 = scmp.eq.s32.totalorder %s20, 0
      %p62 = por %p60, %p61
      %p63 = scmp.ne.s32.totalorder %s51, %s52
      %p64 = scmp.eq.s32.totalorder %s21, 1
      %p65 = por %p63, %p64
      %p67 = scmp.ne.s32.totalorder %s52, %s66
      %p68 = scmp.eq.s32.totalorder %s21, 0
      %p69 = por %p67, %p68
      %s71 = sadd.s32 %s70, 1
      %p74 = scmp.eq.s32.totalorder %s15, 1
      %p75 = scmp.ne.s32.totalorder %s70, %s72
      %p76 = scmp.eq.s32.totalorder %s15, 0
      %p77 = por %p75, %p76
      %p78 = scmp.ne.s32.totalorder %s70, %s72
      %p79 = scmp.eq.s32.totalorder %s20, 1
      %p80 = por %p78, %p79
      %p81 = scmp.ne.s32.totalorder %s72, %s73
      %p82 = scmp.eq.s32.totalorder %s20, 0
      %p83 = por %p81, %p82
      %p84 = scmp.ne.s32.totalorder %s72, %s73
      %p85 = scmp.eq.s32.totalorder %s21, 1
      %p86 = por %p84, %p85
      %p88 = scmp.ne.s32.totalorder %s73, %s87
      %p89 = scmp.eq.s32.totalorder %s21, 0
      %p90 = por %p88, %p89
      %s92 = sadd.s32 %s91, 1
      %p95 = scmp.eq.s32.totalorder %s15, 1
      %p96 = scmp.ne.s32.totalorder %s91, %s93
      %p97 = scmp.eq.s32.totalorder %s15, 0
      %p98 = por %p96, %p97
      %p99 = scmp.ne.s32.totalorder %s91, %s93
      %p100 = scmp.eq.s32.totalorder %s20, 1
      %p101 = por %p99, %p100
      %p102 = scmp.ne.s32.totalorder %s93, %s94
      %p103 = scmp.eq.s32.totalorder %s20, 0
      %p104 = por %p102, %p103
      %p105 = scmp.ne.s32.totalorder %s93, %s94
      %p106 = scmp.eq.s32.totalorder %s21, 1
      %p107 = por %p105, %p106
      %p109 = scmp.ne.s32.totalorder %s94, %s108
      %p110 = scmp.eq.s32.totalorder %s21, 0
      %p111 = por %p109, %p110
      %s113 = sadd.s32 %s112, 1
      %p116 = scmp.eq.s32.totalorder %s15, 1
      %p117 = scmp.ne.s32.totalorder %s112, %s114
      %p118 = scmp.eq.s32.totalorder %s15, 0
      %p119 = por %p117, %p118
      %p120 = scmp.ne.s32.totalorder %s112, %s114
      %p121 = scmp.eq.s32.totalorder %s20, 1
      %p122 = por %p120, %p121
      %p123 = scmp.ne.s32.totalorder %s114, %s115
      %p124 = scmp.eq.s32.totalorder %s20, 0
      %p125 = por %p123, %p124
      %p126 = scmp.ne.s32.totalorder %s114, %s115
      %p127 = scmp.eq.s32.totalorder %s21, 1
      %p128 = por %p126, %p127
      %p130 = scmp.ne.s32.totalorder %s115, %s129
      %p131 = scmp.eq.s32.totalorder %s21, 0
      %p132 = por %p130, %p131
      %s134 = sadd.s32 %s133, 1
      %p137 = scmp.eq.s32.totalorder %s15, 1
      %p138 = scmp.ne.s32.totalorder %s133, %s135
      %p139 = scmp.eq.s32.totalorder %s15, 0
      %p140 = por %p138, %p139
      %p141 = scmp.ne.s32.totalorder %s133, %s135
      %p142 = scmp.eq.s32.totalorder %s20, 1
      %p143 = por %p141, %p142
      %p144 = scmp.ne.s32.totalorder %s135, %s136
      %p145 = scmp.eq.s32.totalorder %s20, 0
      %p146 = por %p144, %p145
      %p147 = scmp.ne.s32.totalorder %s135, %s136
      %p148 = scmp.eq.s32.totalorder %s21, 1
      %p149 = por %p147, %p148
      %p151 = scmp.ne.s32.totalorder %s136, %s150
      %p152 = scmp.eq.s32.totalorder %s21, 0
      %p153 = por %p151, %p152
      %s154 = ssub.s32 %s15, %s22
      %p155 = scmp.eq.s32.totalorder %s154, 0
      %s157 = sadd.s32 %s156, 1
      %s158 = scalar_select %p155, %s156, %s157
      %p161 = pneg %p155
      %p162 = scmp.eq.s32.totalorder %s15, 1
      %p163 = por %p161, %p162
      %p164 = scmp.ne.s32.totalorder %s156, %s159
      %p165 = scmp.eq.s32.totalorder %s15, 0
      %p166 = por %p164, %p165
      %p167 = scmp.ne.s32.totalorder %s156, %s159
      %p168 = scmp.eq.s32.totalorder %s20, 1
      %p169 = por %p167, %p168
      %p170 = scmp.ne.s32.totalorder %s159, %s160
      %p171 = scmp.eq.s32.totalorder %s20, 0
      %p172 = por %p170, %p171
      %p173 = scmp.ne.s32.totalorder %s159, %s160
      %p174 = scmp.eq.s32.totalorder %s21, 1
      %p175 = por %p173, %p174
      %p177 = scmp.ne.s32.totalorder %s160, %s176
      %p178 = scmp.eq.s32.totalorder %s21, 0
      %p179 = por %p177, %p178
      %p180 = scmp.le.s32.totalorder 1, %s15
      %p181 = scmp.lt.s32.totalorder %s15, 3
      %p182 = pnand %p180, %p181
      %p183 = pneg %p182
      // Predicated region
      $region9: #{tpu_custom_call.1} parent=5 // pred_check
        _
      $region10: #{tpu_custom_call.1} parent=5 // pred_check_branch
        %185 = sbr.rel (%p182) target = $region12
      $region11: #{tpu_custom_call.1} parent=5 // pred_region
        %s186 = ssub.s32 %s15, 1
        // Predicated region
        $region13: #{tpu_custom_call.1} parent=11 // pred_check
          %p187 = pneg %p62
        $region14: #{tpu_custom_call.1} parent=11 // pred_check_branch
          %189 = sbr.rel (%p187) target = $region16
        $region15: #{tpu_custom_call.1} parent=11 // pred_region
          _
        $region16: #{tpu_custom_call.1} parent=11 // pred_fallthru
          _
        // Predicated region
        $region17: #{tpu_custom_call.1} parent=11 // pred_check
          %p190 = pneg %p83
        $region18: #{tpu_custom_call.1} parent=11 // pred_check_branch
          %192 = sbr.rel (%p190) target = $region20
        $region19: #{tpu_custom_call.1} parent=11 // pred_region
          _
        $region20: #{tpu_custom_call.1} parent=11 // pred_fallthru
          _
        // Predicated region
        $region21: #{tpu_custom_call.1} parent=11 // pred_check
          %p193 = pneg %p104
        $region22: #{tpu_custom_call.1} parent=11 // pred_check_branch
          %195 = sbr.rel (%p193) target = $region24
        $region23: #{tpu_custom_call.1} parent=11 // pred_region
          _
        $region24: #{tpu_custom_call.1} parent=11 // pred_fallthru
          _
        // Predicated region
        $region25: #{tpu_custom_call.1} parent=11 // pred_check
          %p196 = pneg %p125
        $region26: #{tpu_custom_call.1} parent=11 // pred_check_branch
          %198 = sbr.rel (%p196) target = $region28
        $region27: #{tpu_custom_call.1} parent=11 // pred_region
          _
        $region28: #{tpu_custom_call.1} parent=11 // pred_fallthru
          _
        // Predicated region
        $region29: #{tpu_custom_call.1} parent=11 // pred_check
          %p199 = pneg %p146
        $region30: #{tpu_custom_call.1} parent=11 // pred_check_branch
          %201 = sbr.rel (%p199) target = $region32
        $region31: #{tpu_custom_call.1} parent=11 // pred_region
          _
        $region32: #{tpu_custom_call.1} parent=11 // pred_fallthru
          _
      $region12: #{tpu_custom_call.1} parent=5 // pred_fallthru
        _
      %p202 = scmp.lt.s32.totalorder %s15, 2
      // Predicated region
      $region33: #{tpu_custom_call.1} parent=5 // pred_check
        %p203 = pneg %p202
      $region34: #{tpu_custom_call.1} parent=5 // pred_check_branch
        %205 = sbr.rel (%p203) target = $region36
      $region35: #{tpu_custom_call.1} parent=5 // pred_region
        // Predicated region
        $region37: #{tpu_custom_call.1} parent=35 // pred_check
          %p206 = pneg %p35
        $region38: #{tpu_custom_call.1} parent=35 // pred_check_branch
          %208 = sbr.rel (%p206) target = $region40
        $region39: #{tpu_custom_call.1} parent=35 // pred_region
          %p209 = scmp.lt.s32.totalorder %s15, 1
          %s210 = scalar_select %p209, %s15, 1
          %s211 = smul.addr %s210, 2
          %s212 = smul.addr %s211, 4
          %s213 = scalar_lea.vmem %s0, %s212
        $region40: #{tpu_custom_call.1} parent=35 // pred_fallthru
          _
      $region36: #{tpu_custom_call.1} parent=5 // pred_fallthru
        _
      %p214 = scmp.le.s32.totalorder 1, %s15
      %p215 = scmp.lt.s32.totalorder %s15, 3
      %p216 = pnand %p214, %p215
      %p217 = pneg %p216
      // Predicated region
      $region41: #{tpu_custom_call.1} parent=5 // pred_check
        _
      $region42: #{tpu_custom_call.1} parent=5 // pred_check_branch
        %219 = sbr.rel (%p216) target = $region44
      $region43: #{tpu_custom_call.1} parent=5 // pred_region
        %s220 = ssub.s32 %s15, 1
        %p221 = scmp.lt.s32.totalorder %s20, 1
        %s222 = scalar_select %p221, %s20, 1
        %s223 = smul.addr %s222, 2
        %s224 = smul.addr %s223, 4
        %s225 = scalar_lea.vmem %s0, %s224
        %p226 = pneg %p41
        %p227 = pneg %p38
        %p228 = pneg %p62
        %p229 = pneg %p59
        %p230 = pneg %p83
        %p231 = pneg %p80
        %p232 = pneg %p104
        %p233 = pneg %p101
        %p234 = pneg %p125
        %p235 = pneg %p122
        %p236 = pneg %p146
        %p237 = pneg %p143
        %p238 = pneg %p172
        %p239 = pneg %p169
        %s240 = sand.u32 %s159, 1
        %s241 = scalar_lea.sflag [#allocation3], %s240
        %s242 = sand.u32 %s159, 1
        %s243 = smul.addr %s242, 4
        %s244 = scalar_lea.vmem [#allocation2], %s243
        %p245 = scmp.lt.s32.totalorder %s20, 1
        %s246 = scalar_select %p245, %s20, 1
        %s247 = smul.addr %s246, 2
        %s248 = smul.addr %s247, 4
        %s249 = scalar_lea.vmem %s0, %s248
        %v251 = vld [vmem:[%s249] sm:$0xff]
        %v253 = vcombine.high %v251, %v251
        %v255 = vpack.c.bf16 %v251, %v251
        %v256 = vpack.c.bf16 %v253, %v253
        %v257 = vld [vmem:[%s1] sm:$0xf]
        %v258 = vld [vmem:[%s1 + $0x4] sm:$0xf]
        %v259 = vld [vmem:[%s1 + $0x8] sm:$0xf]
        %v260 = vld [vmem:[%s1 + $0xc] sm:$0xf]
        %v261 = vld [vmem:[%s1 + $0x10] sm:$0xf]
        %v262 = vld [vmem:[%s1 + $0x14] sm:$0xf]
        %v263 = vld [vmem:[%s1 + $0x18] sm:$0xf]
        %v264 = vld [vmem:[%s1 + $0x1c] sm:$0xf]
        %v265 = vld [vmem:[%s1 + $0x20] sm:$0xf]
        %v266 = vld [vmem:[%s1 + $0x24] sm:$0xf]
        %v267 = vld [vmem:[%s1 + $0x28] sm:$0xf]
        %v268 = vld [vmem:[%s1 + $0x2c] sm:$0xf]
        %v269 = vld [vmem:[%s1 + $0x30] sm:$0xf]
        %v270 = vld [vmem:[%s1 + $0x34] sm:$0xf]
        %v271 = vld [vmem:[%s1 + $0x38] sm:$0xf]
        %v272 = vld [vmem:[%s1 + $0x3c] sm:$0xf]
        %v273 = vld [vmem:[%s1 + $0x40] sm:$0xf]
        %v274 = vld [vmem:[%s1 + $0x44] sm:$0xf]
        %v275 = vld [vmem:[%s1 + $0x48] sm:$0xf]
        %v276 = vld [vmem:[%s1 + $0x4c] sm:$0xf]
        %v277 = vld [vmem:[%s1 + $0x50] sm:$0xf]
        %v278 = vld [vmem:[%s1 + $0x54] sm:$0xf]
        %v279 = vld [vmem:[%s1 + $0x58] sm:$0xf]
        %v280 = vld [vmem:[%s1 + $0x5c] sm:$0xf]
        %v305 = vunpack.c.l.b16 %v257
        %v306 = vunpack.c.l.b16 %v258
        %v307 = vunpack.c.l.b16 %v259
        %v308 = vunpack.c.l.b16 %v260
        %v309 = vunpack.c.l.b16 %v261
        %v310 = vunpack.c.l.b16 %v262
        %v311 = vunpack.c.l.b16 %v263
        %v312 = vunpack.c.l.b16 %v264
        %v313 = vunpack.c.l.b16 %v265
        %v314 = vunpack.c.l.b16 %v266
        %v315 = vunpack.c.l.b16 %v267
        %v316 = vunpack.c.l.b16 %v268
        %v317 = vunpack.c.l.b16 %v269
        %v318 = vunpack.c.l.b16 %v270
        %v319 = vunpack.c.l.b16 %v271
        %v320 = vunpack.c.l.b16 %v272
        %v321 = vunpack.c.l.b16 %v273
        %v322 = vunpack.c.l.b16 %v274
        %v323 = vunpack.c.l.b16 %v275
        %v324 = vunpack.c.l.b16 %v276
        %v325 = vunpack.c.l.b16 %v277
        %v326 = vunpack.c.l.b16 %v278
        %v327 = vunpack.c.l.b16 %v279
        %v328 = vunpack.c.l.b16 %v280
        %v329 = vpack.c.b16 %v306, %v305
        %v330 = vpack.c.b16 %v308, %v307
        %v331 = vpack.c.b16 %v310, %v309
        %v332 = vpack.c.b16 %v312, %v311
        %v333 = vpack.c.b16 %v314, %v313
        %v334 = vpack.c.b16 %v316, %v315
        %v335 = vpack.c.b16 %v318, %v317
        %v336 = vpack.c.b16 %v320, %v319
        %v337 = vpack.c.b16 %v322, %v321
        %v338 = vpack.c.b16 %v324, %v323
        %v339 = vpack.c.b16 %v326, %v325
        %v340 = vpack.c.b16 %v328, %v327
        %vm353 = vcmask 523264
        %v355 = vsel %vm353, %v256, 0
        %357 = vmatprep.subr.bf16.mxu0 0
        %358 = vmatpush1.bf16.msra.mxu0 %v329
        %359 = vmatprep.subr.bf16.mxu0 0
        %360 = vmatpush1.bf16.msra.mxu0 %v330
        %361 = vmatprep.subr.bf16.mxu0 0
        %362 = vmatpush1.bf16.msra.mxu0 %v331
        %363 = vmatprep.subr.bf16.mxu0 0
        %364 = vmatpush1.bf16.msra.mxu0 %v332
        %365 = vmatprep.subr.bf16.mxu0 0
        %366 = vmatpush1.bf16.msra.mxu0 %v333
        %367 = vmatprep.subr.bf16.mxu0 0
        %368 = vmatpush1.bf16.msra.mxu0 %v334
        %369 = vmatprep.subr.bf16.mxu0 0
        %370 = vmatpush1.bf16.msra.mxu0 %v335
        %371 = vmatprep.subr.bf16.mxu0 0
        %372 = vmatpush1.bf16.msra.mxu0 %v336
        %373 = vmatprep.subr.bf16.mxu0 0
        %374 = vmatpush1.bf16.msra.mxu0 %v337
        %375 = vmatprep.subr.bf16.mxu0 0
        %376 = vmatpush1.bf16.msra.mxu0 %v338
        %377 = vmatprep.subr.bf16.mxu0 0
        %378 = vmatpush1.bf16.msra.mxu0 %v339
        %379 = vmatprep.subr.bf16.mxu0 0
        %380 = vmatpush1.bf16.msra.mxu0 %v340
        %381 = vmatprep.subr.bf16.mxu0 0
        %382 = vmatpush1.bf16.msra.mxu0 0
        %383 = vmatprep.subr.bf16.mxu0 0
        %384 = vmatpush1.bf16.msra.mxu0 0
        %385 = vmatprep.subr.bf16.mxu0 0
        %386 = vmatpush1.bf16.msra.mxu0 0
        %387 = vmatprep.subr.bf16.mxu0 0
        %388 = vmatpush1.bf16.msra.mxu0 0
        %389 = vmatprep.mubr.bf16.mxu0 %v355
        %390 = vmatmul.mubr.bf16.gmra.mrb[0].mxu0 %v255
        %v391 = vpop.f32.mrb[0].mxu0
        %v392 = vadd.f32 0.0, %v391
        %v393 = vpop.f32.mrb[0].mxu0
        %v394 = vpop.f32.mrb[0].mxu0
        %v395 = vpop.f32.mrb[0].mxu0
        %396 = vdwg.mxu0
        %v397 = vld [vmem:[%s2] sm:$0x1]
        %v399 = vrot.slane %v392, 7
        %vm401 = vcmask 1040384
        %v402 = vsel %vm401, %v397, %v399
        %v403 = vld [vmem:[%s3] sm:$0x1f]
        %v404 = vadd.f32 %v402, %v403
        %v405 = vld [vmem:[%s4] sm:$0x1]
        %v406 = vld [vmem:[%s5] sm:$0x1]
        %vm407 = vcmask 258048
        %v408 = vsel %vm407, %v404, 0.0
        %409 = vadd.xlane.f32.xlu0 %v408
        %v410 = vpop.xlane.xlu0 %409
        %v411 = vrcp.pop 32.0
        %v412 = vmul.f32 %v410, %v411
        %v413 = vsub.f32 %v404, %v412
        %v414 = vmul.f32 %v413, %v413
        %v415 = vsel %vm407, %v414, 0.0
        %416 = vadd.xlane.f32.xlu0 %v415
        %v417 = vpop.xlane.xlu0 %416
        %v418 = vmul.f32 %v417, %v411
        %v419 = vadd.f32 %v418, 1e-05
        %v420 = vrsqrt.pop %v419
        %v421 = vmul.f32 %v413, %v420
        %v423 = vlaneseq
        %v424 = vshrl.u32 %v423, 7
        %v425 = vsub.s32 0, %v424
        %v426 = vrot.slane %v405, %v425
        %v428 = vmul.f32 %v421, %v426
        %v430 = vlaneseq
        %v431 = vshrl.u32 %v430, 7
        %v432 = vsub.s32 0, %v431
        %v433 = vrot.slane %v406, %v432
        %v435 = vadd.f32 %v428, %v433
        %vm436 = vcmask 1044480
        %v437 = vsel %vm436, %v435, 0.0
        %v438 = vpack.c.bf16 %v437, %v437
        %vm439 = vcmask 257024
        %440 = vst.msk [vmem:[%s244] sm:$0xf] %vm439, %v438
        %s441 = sand.u32 %s159, 1
        %s442 = scalar_lea.sflag [#allocation3], %s441
        %s443 = sand.u32 %s159, 1
        %s444 = smul.addr %s443, 4
        %s445 = scalar_lea.vmem [#allocation2], %s444
        // Predicated region
        $region45: #{tpu_custom_call.1} parent=43 // pred_check
          %p446 = pneg %p169
        $region46: #{tpu_custom_call.1} parent=43 // pred_check_branch
          %448 = sbr.rel (%p446) target = $region48
        $region47: #{tpu_custom_call.1} parent=43 // pred_region
          %s450 = ssub.s32 64, 64
          %451 = vsyncadd %s442, %s450
          %s452 = smul.addr %s20, 64
          %s453 = scalar_lea.hbm %s6, %s452
          %s455 = sshll.u32 %s445, 4
          %s456 = int_to_ptr.vmem [resolvable:$true] %s455
          %458 = dma.vmem_to_hbm [thread:$0]  %s456, 64, %s453, %s442
        $region48: #{tpu_custom_call.1} parent=43 // pred_fallthru
          _
      $region44: #{tpu_custom_call.1} parent=5 // pred_fallthru
        _
      %p459 = scmp.le.s32.totalorder 2, %s15
      // Predicated region
      $region49: #{tpu_custom_call.1} parent=5 // pred_check
        %p460 = pneg %p459
      $region50: #{tpu_custom_call.1} parent=5 // pred_check_branch
        %462 = sbr.rel (%p460) target = $region52
      $region51: #{tpu_custom_call.1} parent=5 // pred_region
        %s463 = ssub.s32 %s15, 2
        // Predicated region
        $region53: #{tpu_custom_call.1} parent=51 // pred_check
          %p464 = pneg %p175
        $region54: #{tpu_custom_call.1} parent=51 // pred_check_branch
          %466 = sbr.rel (%p464) target = $region56
        $region55: #{tpu_custom_call.1} parent=51 // pred_region
          %s467 = sand.u32 %s160, 1
          %s468 = scalar_lea.sflag [#allocation3], %s467
          %s469 = sand.u32 %s160, 1
          %s470 = smul.addr %s469, 4
          %s471 = scalar_lea.vmem [#allocation2], %s470
          %472 = dma.done %s468, 64
        $region56: #{tpu_custom_call.1} parent=51 // pred_fallthru
          _
      $region52: #{tpu_custom_call.1} parent=5 // pred_fallthru
        _
    $region6: #{tpu_custom_call.1} parent=1 // loop_footer
      %s19 = sadd.s32 1, %s15
    $region7: #{tpu_custom_call.1} parent=1 // loop_footer_branch
      %14 = sbr.rel target = $region3
    $region8: #{tpu_custom_call.1} parent=1 // loop_exit
      _
    %473 = vsyncpa [#allocation3], 1
    %s474 = scalar_lea.sflag [#allocation3], 1
    %475 = vsyncpa %s474, 1

</llo_original>
